<compile_context>
chip_gen: v5e
topology: v5e:2x2
jax: 0.10.0
libtpu: 0.0.40
codegen_flags: <defaults>
</compile_context>

<pallas_src>
import math

import jax
import jax.numpy as jnp
from jax.experimental import pallas as pl
from jax.experimental.pallas import tpu as pltpu


def _round_up(x, m):
    return ((x + m - 1) // m) * m


def _pick_row_tile(ho, target_rows):
    """Pick a row tile near `target_rows`, preferring divisors of Ho."""
    target_rows = max(1, min(int(target_rows), ho))
    divisors = [t for t in range(1, ho + 1) if ho % t == 0]
    best = min(divisors, key=lambda t: abs(t - target_rows))
    if target_rows // 2 <= best <= 2 * target_rows:
        return best
    return target_rows


def _make_conv_kernel(n_phases, phase_plane_idx, row_off, th, wp, align):
    """kh dots with K = kw*Cin, accumulated directly into the f32 output block."""
    kh = len(row_off)

    def kernel(*refs):
        plane_refs = refs[:n_phases]        # each (1, hs*wp, kw*Cin)  bf16
        w_ref = refs[n_phases]              # (kh, kw*Cin, tcout)      bf16
        o_ref = refs[n_phases + 1]          # (1, th*wp, tcout)        f32

        r = pl.program_id(1)
        for i in range(kh):
            start = pl.multiple_of((r * th + row_off[i]) * wp, align)
            patch = plane_refs[phase_plane_idx[i]][0, pl.ds(start, th * wp), :]
            contrib = jnp.dot(patch, w_ref[i],
                              preferred_element_type=jnp.float32)
            if i == 0:
                o_ref[0] = contrib
            else:
                o_ref[0] += contrib

    return kernel


def conv2d_transition_block_dilation(x, weight, *, dilation=2, stride=2,
                                     compute_dtype=jnp.bfloat16):
    """x: (N, Cin, H, W) f32; weight: (Cout, Cin, 3, 3) f32 -> (N, Cout, Ho, Wo) f32."""
    N, Cin, H, W = x.shape
    Cout, Cin_w, kh, kw = weight.shape
    assert Cin_w == Cin
    d, s = int(dilation), int(stride)
    pad = d
    Ho = (H + 2 * pad - d * (kh - 1) - 1) // s + 1
    Wo = (W + 2 * pad - d * (kw - 1) - 1) // s + 1

    # Tap (i, j) reads padded pixel (oh*s + i*d, ow*s + j*d).  Split the row
    # index into a stride phase p_i = (i*d) % s and offset a_i = (i*d)//s so
    # inside the kernel every row tap is a contiguous slice of one plane.
    row_phase = [(i * d) % s for i in range(kh)]
    row_off = [(i * d) // s for i in range(kh)]
    amax = max(row_off)

    # Pad the flattened row pitch to a multiple of 16 (bf16 sublane tile) so
    # dynamic tap slices are tile-aligned.  `align` is the guaranteed power-of-2
    # divisor of every slice start (kept in sync with the padded pitch).
    wp = _round_up(Wo, 16)
    align = wp & (-wp)
    kcin = kw * Cin

    # ---- generation-aware sizing -------------------------------------------
    vmem_cap = None
    try:
        info = pltpu.get_tpu_info()
        for name in ("vmem_capacity_bytes", "vmem_bytes", "vmem_size_bytes"):
            v = getattr(info, name, None)
            if v:
                vmem_cap = int(v)
                break
    except Exception:
        vmem_cap = None
    if vmem_cap is None:
        vmem_cap = 64 * 1024 * 1024          # conservative (v7x-sized) fallback

    big_vmem = vmem_cap >= 100 * 1024 * 1024  # v5e / v6e: 128 MiB
    target_positions = 1024 if big_vmem else 512
    vmem_limit = min(96 * 1024 * 1024 if big_vmem else 48 * 1024 * 1024,
                     vmem_cap - 8 * 1024 * 1024)
    vmem_limit = max(vmem_limit, 16 * 1024 * 1024)

    # Row tile: ~target output positions per grid step, preferring a divisor
    # of Ho (no discarded partial tile).
    th = _pick_row_tile(Ho, max(1, target_positions // wp))
    n_row_tiles = pl.cdiv(Ho, th)
    hs = n_row_tiles * th + amax              # plane rows (covers last tile + halo)

    # Cout tile: keep stores / accumulator within one 128-lane tile.
    tcout = Cout if Cout <= 128 else 128
    n_cout_tiles = pl.cdiv(Cout, tcout)

    # ---- XLA glue: build per-row-phase planes with packed column taps -------
    # plane[p][n, oh, ow, j*Cin+c] = x_pad[n, p + oh*s, j*d + ow*s, c]
    # (cast to bf16 first so the pad / gather passes move half the bytes; XLA
    #  fuses cast+transpose+pad+strided-slice into the plane gathers).
    x_nhwc = jnp.transpose(x.astype(compute_dtype), (0, 2, 3, 1))
    x_pad = jnp.pad(x_nhwc, ((0, 0), (pad, pad), (pad, pad), (0, 0)))

    phases = sorted(set(row_phase))
    phase_plane_idx = [phases.index(p) for p in row_phase]

    planes = []
    for p in phases:
        taps = [x_pad[:, p::s, j * d::s, :][:, :hs, :Wo, :] for j in range(kw)]
        g = jnp.concatenate(taps, axis=-1)                 # (N, <=hs, Wo, kw*Cin)
        g = jnp.pad(g, ((0, 0), (0, hs - g.shape[1]), (0, wp - Wo), (0, 0)))
        planes.append(g.reshape(N, hs * wp, kcin))

    # Weights -> (kh, kw*Cin, Cout): column taps packed into K, bf16.
    w_packed = jnp.transpose(weight, (2, 3, 1, 0)).reshape(kh, kcin, Cout)
    w_packed = w_packed.astype(compute_dtype)

    # ---- BlockSpecs ----------------------------------------------------------
    plane_bytes = hs * wp * kcin * 2
    w_bytes = kh * kcin * tcout * 2
    out_bytes = th * wp * tcout * 4
    est_double_buffered = 2 * (len(phases) * plane_bytes + w_bytes + out_bytes)
    # Batch-resident blocks revisit the same data across row/cout tiles, so
    # single-buffering them is ~free; only do it when double-buffering is tight
    # (v7x-style 64 MiB VMEM).
    single_buffer = est_double_buffered > int(0.6 * vmem_cap)

    def _spec(block, index_map, single):
        if single:
            try:
                return pl.BlockSpec(block, index_map,
                                    pipeline_mode=pl.Buffered(1))
            except Exception:
                pass
        return pl.BlockSpec(block, index_map)

    plane_specs = [_spec((1, hs * wp, kcin), lambda n, r, c: (n, 0, 0),
                         single_buffer) for _ in phases]
    w_spec = _spec((kh, kcin, tcout), lambda n, r, c: (0, 0, c), single_buffer)
    out_spec = pl.BlockSpec((1, th * wp, tcout), lambda n, r, c: (n, r, c))

    kernel = _make_conv_kernel(len(phases), phase_plane_idx, row_off,
                               th, wp, align)

    flops = 2 * N * Ho * Wo * Cout * kh * kw * Cin
    bytes_accessed = int(sum(int(pln.size) for pln in planes) * 2
                         + int(w_packed.size) * 2
                         + N * Ho * wp * Cout * 4)

    out_flat = pl.pallas_call(
        kernel,
        out_shape=jax.ShapeDtypeStruct((N, Ho * wp, Cout), jnp.float32),
        grid_spec=pltpu.PrefetchScalarGridSpec(
            num_scalar_prefetch=0,
            grid=(N, n_row_tiles, n_cout_tiles),
            in_specs=plane_specs + [w_spec],
            out_specs=out_spec,
        ),
        compiler_params=pltpu.CompilerParams(
            # batch / Cout shardable across cores; row tiles revisit the
            # batch-resident planes sequentially.
            dimension_semantics=("parallel", "arbitrary", "parallel"),
            vmem_limit_bytes=int(vmem_limit),
        ),
        cost_estimate=pl.CostEstimate(flops=flops, transcendentals=0,
                                      bytes_accessed=bytes_accessed),
    )(*planes, w_packed)

    # Drop the padded columns, back to NCHW (PyTorch interface).  An NHWC
    # consumer could take out_flat.reshape(N, Ho, wp, Cout)[:, :, :Wo, :].
    out = out_flat.reshape(N, Ho, wp, Cout)[:, :, :Wo, :]
    return jnp.transpose(out, (0, 3, 1, 2))


if __name__ == "__main__":
    key = jax.random.PRNGKey(0)
    k_x, k_w = jax.random.split(key)

    N, inC, H, W = 2, 4, 16, 16
    outC, dilation = 8, 2

    x = jax.random.normal(k_x, (N, inC, H, W), dtype=jnp.float32)
    weight = jax.random.normal(k_w, (outC, inC, 3, 3), dtype=jnp.float32) * 0.1

    conv_fn = jax.jit(
        lambda xx, ww: conv2d_transition_block_dilation(xx, ww, dilation=dilation))
    out = jax.block_until_ready(conv_fn(x, weight))

    # Reference 1: same bf16-rounded operands, f32 math (tight tolerance).
    xq = x.astype(jnp.bfloat16).astype(jnp.float32)
    wq = weight.astype(jnp.bfloat16).astype(jnp.float32)
    ref_q = jax.lax.conv_general_dilated(
        xq, wq, window_strides=(2, 2),
        padding=((dilation, dilation), (dilation, dilation)),
        rhs_dilation=(dilation, dilation),
        dimension_numbers=("NCHW", "OIHW", "NCHW"),
        precision=jax.lax.Precision.HIGHEST)
    assert out.shape == ref_q.shape, (out.shape, ref_q.shape)
    assert jnp.allclose(out, ref_q, atol=1e-3, rtol=1e-3), \
        "mismatch vs bf16-rounded reference conv"

    # Reference 2: pure f32 reference (loose tolerance: bf16 input rounding only).
    ref_f32 = jax.lax.conv_general_dilated(
        x, weight, window_strides=(2, 2),
        padding=((dilation, dilation), (dilation, dilation)),
        rhs_dilation=(dilation, dilation),
        dimension_numbers=("NCHW", "OIHW", "NCHW"),
        precision=jax.lax.Precision.HIGHEST)
    assert jnp.allclose(out, ref_f32, atol=3e-2, rtol=3e-2), \
        "mismatch vs f32 reference conv"

    print("KERNEL_OK")
</pallas_src>

<mosaic_0001>
module attributes {stable_mosaic.version = 11 : i64} {
  func.func @kernel(%arg0: i32, %arg1: i32, %arg2: i32, %arg3: memref<1x160x12xbf16, #tpu.memory_space<vmem>>, %arg4: memref<3x12x8xbf16, #tpu.memory_space<vmem>>, %arg5: memref<1x128x8xf32, #tpu.memory_space<vmem>>) attributes {dimension_semantics = [#tpu.dimension_semantics<parallel>, #tpu.dimension_semantics<arbitrary>, #tpu.dimension_semantics<parallel>], iteration_bounds = array<i64: 2, 1, 1>, scalar_prefetch = 0 : i64, scratch_operands = 0 : i64, tpu.core_type = #tpu.core_type<tc>, window_params = [{transform_indices = @transform_0, window_bounds = array<i64: 1, 160, 12>}, {transform_indices = @transform_1, window_bounds = array<i64: 3, 12, 8>}, {transform_indices = @transform_2, window_bounds = array<i64: 1, 128, 8>}]} {
    %c8_i32 = arith.constant 8 : i32
    %0 = arith.muli %arg1, %c8_i32 : i32
    %c0_i32 = arith.constant 0 : i32
    %1 = arith.addi %0, %c0_i32 : i32
    %c16_i32 = arith.constant 16 : i32
    %2 = arith.muli %1, %c16_i32 : i32
    %3 = tpu.assume_multiple %2, 16 : i32
    %c0 = arith.constant 0 : index
    %4 = arith.index_cast %3 : i32 to index
    %c0_0 = arith.constant 0 : index
    %5 = vector.load %arg3[%c0, %4, %c0_0] : memref<1x160x12xbf16, #tpu.memory_space<vmem>>, vector<1x128x12xbf16>
    %6 = vector.shape_cast %5 : vector<1x128x12xbf16> to vector<128x12xbf16>
    %c0_1 = arith.constant 0 : index
    %c0_2 = arith.constant 0 : index
    %c0_3 = arith.constant 0 : index
    %7 = vector.load %arg4[%c0_1, %c0_2, %c0_3] : memref<3x12x8xbf16, #tpu.memory_space<vmem>>, vector<1x12x8xbf16>
    %8 = vector.shape_cast %7 : vector<1x12x8xbf16> to vector<12x8xbf16>
    %cst = arith.constant dense<0.000000e+00> : vector<128x8xf32>
    %9 = tpu.matmul %6, %8, %cst {dimension_numbers = #tpu.dot_dimension_numbers<[1], [0], [0], [1], [0, 0, 1, 1], [], []>} : vector<128x12xbf16>, vector<12x8xbf16>, vector<128x8xf32> -> vector<128x8xf32>
    %c0_4 = arith.constant 0 : index
    %c0_5 = arith.constant 0 : index
    %c0_6 = arith.constant 0 : index
    %10 = vector.load %arg5[%c0_4, %c0_5, %c0_6] : memref<1x128x8xf32, #tpu.memory_space<vmem>>, vector<1x128x8xf32>
    %11 = vector.shape_cast %10 : vector<1x128x8xf32> to vector<128x8xf32>
    %12 = vector.shape_cast %9 : vector<128x8xf32> to vector<1x128x8xf32>
    tpu.vector_store %arg5[%c0_4, %c0_5, %c0_6], %12 {strides = array<i32>} : memref<1x128x8xf32, #tpu.memory_space<vmem>>, vector<1x128x8xf32>,
    %c8_i32_7 = arith.constant 8 : i32
    %13 = arith.muli %arg1, %c8_i32_7 : i32
    %c1_i32 = arith.constant 1 : i32
    %14 = arith.addi %13, %c1_i32 : i32
    %c16_i32_8 = arith.constant 16 : i32
    %15 = arith.muli %14, %c16_i32_8 : i32
    %16 = tpu.assume_multiple %15, 16 : i32
    %c0_9 = arith.constant 0 : index
    %17 = arith.index_cast %16 : i32 to index
    %c0_10 = arith.constant 0 : index
    %18 = vector.load %arg3[%c0_9, %17, %c0_10] : memref<1x160x12xbf16, #tpu.memory_space<vmem>>, vector<1x128x12xbf16>
    %19 = vector.shape_cast %18 : vector<1x128x12xbf16> to vector<128x12xbf16>
    %c1 = arith.constant 1 : index
    %c0_11 = arith.constant 0 : index
    %c0_12 = arith.constant 0 : index
    %20 = vector.load %arg4[%c1, %c0_11, %c0_12] : memref<3x12x8xbf16, #tpu.memory_space<vmem>>, vector<1x12x8xbf16>
    %21 = vector.shape_cast %20 : vector<1x12x8xbf16> to vector<12x8xbf16>
    %cst_13 = arith.constant dense<0.000000e+00> : vector<128x8xf32>
    %22 = tpu.matmul %19, %21, %cst_13 {dimension_numbers = #tpu.dot_dimension_numbers<[1], [0], [0], [1], [0, 0, 1, 1], [], []>} : vector<128x12xbf16>, vector<12x8xbf16>, vector<128x8xf32> -> vector<128x8xf32>
    %c0_14 = arith.constant 0 : index
    %c0_15 = arith.constant 0 : index
    %c0_16 = arith.constant 0 : index
    %23 = vector.load %arg5[%c0_14, %c0_15, %c0_16] : memref<1x128x8xf32, #tpu.memory_space<vmem>>, vector<1x128x8xf32>
    %24 = vector.shape_cast %23 : vector<1x128x8xf32> to vector<128x8xf32>
    %25 = arith.addf %24, %22 : vector<128x8xf32>
    %c0_17 = arith.constant 0 : index
    %c0_18 = arith.constant 0 : index
    %c0_19 = arith.constant 0 : index
    %26 = vector.load %arg5[%c0_17, %c0_18, %c0_19] : memref<1x128x8xf32, #tpu.memory_space<vmem>>, vector<1x128x8xf32>
    %27 = vector.shape_cast %26 : vector<1x128x8xf32> to vector<128x8xf32>
    %28 = vector.shape_cast %25 : vector<128x8xf32> to vector<1x128x8xf32>
    tpu.vector_store %arg5[%c0_17, %c0_18, %c0_19], %28 {strides = array<i32>} : memref<1x128x8xf32, #tpu.memory_space<vmem>>, vector<1x128x8xf32>,
    %c8_i32_20 = arith.constant 8 : i32
    %29 = arith.muli %arg1, %c8_i32_20 : i32
    %c2_i32 = arith.constant 2 : i32
    %30 = arith.addi %29, %c2_i32 : i32
    %c16_i32_21 = arith.constant 16 : i32
    %31 = arith.muli %30, %c16_i32_21 : i32
    %32 = tpu.assume_multiple %31, 16 : i32
    %c0_22 = arith.constant 0 : index
    %33 = arith.index_cast %32 : i32 to index
    %c0_23 = arith.constant 0 : index
    %34 = vector.load %arg3[%c0_22, %33, %c0_23] : memref<1x160x12xbf16, #tpu.memory_space<vmem>>, vector<1x128x12xbf16>
    %35 = vector.shape_cast %34 : vector<1x128x12xbf16> to vector<128x12xbf16>
    %c2 = arith.constant 2 : index
    %c0_24 = arith.constant 0 : index
    %c0_25 = arith.constant 0 : index
    %36 = vector.load %arg4[%c2, %c0_24, %c0_25] : memref<3x12x8xbf16, #tpu.memory_space<vmem>>, vector<1x12x8xbf16>
    %37 = vector.shape_cast %36 : vector<1x12x8xbf16> to vector<12x8xbf16>
    %cst_26 = arith.constant dense<0.000000e+00> : vector<128x8xf32>
    %38 = tpu.matmul %35, %37, %cst_26 {dimension_numbers = #tpu.dot_dimension_numbers<[1], [0], [0], [1], [0, 0, 1, 1], [], []>} : vector<128x12xbf16>, vector<12x8xbf16>, vector<128x8xf32> -> vector<128x8xf32>
    %c0_27 = arith.constant 0 : index
    %c0_28 = arith.constant 0 : index
    %c0_29 = arith.constant 0 : index
    %39 = vector.load %arg5[%c0_27, %c0_28, %c0_29] : memref<1x128x8xf32, #tpu.memory_space<vmem>>, vector<1x128x8xf32>
    %40 = vector.shape_cast %39 : vector<1x128x8xf32> to vector<128x8xf32>
    %41 = arith.addf %40, %38 : vector<128x8xf32>
    %c0_30 = arith.constant 0 : index
    %c0_31 = arith.constant 0 : index
    %c0_32 = arith.constant 0 : index
    %42 = vector.load %arg5[%c0_30, %c0_31, %c0_32] : memref<1x128x8xf32, #tpu.memory_space<vmem>>, vector<1x128x8xf32>
    %43 = vector.shape_cast %42 : vector<1x128x8xf32> to vector<128x8xf32>
    %44 = vector.shape_cast %41 : vector<128x8xf32> to vector<1x128x8xf32>
    tpu.vector_store %arg5[%c0_30, %c0_31, %c0_32], %44 {strides = array<i32>} : memref<1x128x8xf32, #tpu.memory_space<vmem>>, vector<1x128x8xf32>,
    return
  }
  func.func @transform_0(%arg0: i32, %arg1: i32, %arg2: i32) -> (i32, i32, i32) {
    %c0_i32 = arith.constant 0 : i32
    %c0_i32_0 = arith.constant 0 : i32
    %c0_i32_1 = arith.constant 0 : i32
    return %arg0, %c0_i32, %c0_i32_0 : i32, i32, i32
  }
  func.func @transform_1(%arg0: i32, %arg1: i32, %arg2: i32) -> (i32, i32, i32) {
    %c0_i32 = arith.constant 0 : i32
    %c0_i32_0 = arith.constant 0 : i32
    %c0_i32_1 = arith.constant 0 : i32
    return %c0_i32, %c0_i32_0, %arg2 : i32, i32, i32
  }
  func.func @transform_2(%arg0: i32, %arg1: i32, %arg2: i32) -> (i32, i32, i32) {
    %c0_i32 = arith.constant 0 : i32
    return %arg0, %arg1, %arg2 : i32, i32, i32
  }
}

</mosaic_0001>

<llo_original>
// kernel: _lambda_.1
$region0: #{_lambda_.1}
  #allocation0 [shape = 'u32[]', space=smem, size = 0x4, offset = 0x4, fixed_abs, tag = 'smem constant byte address 0x4 - core index']
  #allocation1 [shape = 'u32[72,128]{1,0:T(1,128)}', space=vmem, size = 0x9000, scoped, tag = 'internal scratch']
  %s0 = inlined_call_operand.vmem [shape: bf16[2,160,12], index: 0, kind: input, shape index: {}]
  %s1 = inlined_call_operand.vmem [shape: bf16[3,12,8], index: 1, kind: input, shape index: {}]
  %s2 = inlined_call_operand.vmem [shape: f32[2,128,8], index: 2, kind: output, shape index: {}]
  %s3 = sld [smem:[#allocation0]]
  $region41: #{_lambda_.1} parent=0
    _
  %s5 = ssub.s32 1, %s3
  %s6 = scalar_select 0, %s5, %s3
  loop: start=0, step=1, limit=4
  $region2: #{_lambda_.1} parent=0 // loop_pre_header
    _
  $region3: #{_lambda_.1} parent=0 // loop_header
    %s8 = sphi 0, %s12
    %p9 = scmp.ge.s32.totalorder %s8, 4
    %s15 = sphi 0, %s34
    %s16 = sphi 0, %s30
    %s17 = sphi 0, %s26
    %s18 = sphi 0, %s15
    %s19 = sphi 0, %s16
    %s20 = sphi 0, %s17
    %s21 = sphi 0, %s18
    %s22 = sphi 0, %s19
    %s23 = sphi 0, %s20
    %s37 = sphi 0, %s39
    %s40 = sphi 0, %s37
    %s41 = sphi 0, %s40
    %s57 = sphi 0, %s41
    %s63 = sphi 0, %s65
    %s66 = sphi 0, %s63
    %s67 = sphi 0, %s66
    %s83 = sphi 0, %s67
    %s93 = sphi 0, %s95
    %s96 = sphi 0, %s93
    %s97 = sphi 0, %s96
    %s113 = sphi 0, %s97
  $region4: #{_lambda_.1} parent=0 // loop_header_branch
    %11 = sbr.rel (%p9) target = $region8
  $region5: #{_lambda_.1} parent=0 // loop_body
    %s13 = ssub.s32 %s8, 1
    %s14 = ssub.s32 %s8, 2
    %s24 = sadd.s32 1, %s17
    %p25 = scmp.ge.s32.totalorder %s24, 1
    %s26 = scalar_select %p25, 0, %s24
    %s27 = sadd.s32 1, %s16
    %s28 = scalar_select %p25, %s27, %s16
    %p29 = scmp.ge.s32.totalorder %s28, 1
    %s30 = scalar_select %p29, 0, %s28
    %s31 = sadd.s32 1, %s15
    %s32 = scalar_select %p29, %s31, %s15
    %p33 = scmp.ge.s32.totalorder %s32, 2
    %s34 = scalar_select %p33, 0, %s32
    %s35 = ssub.s32 %s15, %s34
    %p36 = scmp.eq.s32.totalorder %s35, 0
    %s38 = sadd.s32 %s37, 1
    %s39 = scalar_select %p36, %s37, %s38
    %p42 = pneg %p36
    %p43 = scmp.eq.s32.totalorder %s8, 1
    %p44 = por %p42, %p43
    %p45 = scmp.ne.s32.totalorder %s37, %s40
    %p46 = scmp.eq.s32.totalorder %s8, 0
    %p47 = por %p45, %p46
    %p48 = scmp.ne.s32.totalorder %s37, %s40
    %p49 = scmp.eq.s32.totalorder %s13, 1
    %p50 = por %p48, %p49
    %p51 = scmp.ne.s32.totalorder %s40, %s41
    %p52 = scmp.eq.s32.totalorder %s13, 0
    %p53 = por %p51, %p52
    %p54 = scmp.ne.s32.totalorder %s40, %s41
    %p55 = scmp.eq.s32.totalorder %s14, 1
    %p56 = por %p54, %p55
    %p58 = scmp.ne.s32.totalorder %s41, %s57
    %p59 = scmp.eq.s32.totalorder %s14, 0
    %p60 = por %p58, %p59
    %s61 = ssub.s32 %s17, %s26
    %p62 = scmp.eq.s32.totalorder %s61, 0
    %s64 = sadd.s32 %s63, 1
    %s65 = scalar_select %p62, %s63, %s64
    %p68 = pneg %p62
    %p69 = scmp.eq.s32.totalorder %s8, 1
    %p70 = por %p68, %p69
    %p71 = scmp.ne.s32.totalorder %s63, %s66
    %p72 = scmp.eq.s32.totalorder %s8, 0
    %p73 = por %p71, %p72
    %p74 = scmp.ne.s32.totalorder %s63, %s66
    %p75 = scmp.eq.s32.totalorder %s13, 1
    %p76 = por %p74, %p75
    %p77 = scmp.ne.s32.totalorder %s66, %s67
    %p78 = scmp.eq.s32.totalorder %s13, 0
    %p79 = por %p77, %p78
    %p80 = scmp.ne.s32.totalorder %s66, %s67
    %p81 = scmp.eq.s32.totalorder %s14, 1
    %p82 = por %p80, %p81
    %p84 = scmp.ne.s32.totalorder %s67, %s83
    %p85 = scmp.eq.s32.totalorder %s14, 0
    %p86 = por %p84, %p85
    %s87 = ssub.s32 %s15, %s34
    %s88 = ssub.s32 %s16, %s30
    %s89 = sor.u32 %s87, %s88
    %s90 = ssub.s32 %s17, %s26
    %s91 = sor.u32 %s89, %s90
    %p92 = scmp.eq.s32.totalorder %s91, 0
    %s94 = sadd.s32 %s93, 1
    %s95 = scalar_select %p92, %s93, %s94
    %p98 = pneg %p92
    %p99 = scmp.eq.s32.totalorder %s8, 1
    %p100 = por %p98, %p99
    %p101 = scmp.ne.s32.totalorder %s93, %s96
    %p102 = scmp.eq.s32.totalorder %s8, 0
    %p103 = por %p101, %p102
    %p104 = scmp.ne.s32.totalorder %s93, %s96
    %p105 = scmp.eq.s32.totalorder %s13, 1
    %p106 = por %p104, %p105
    %p107 = scmp.ne.s32.totalorder %s96, %s97
    %p108 = scmp.eq.s32.totalorder %s13, 0
    %p109 = por %p107, %p108
    %p110 = scmp.ne.s32.totalorder %s96, %s97
    %p111 = scmp.eq.s32.totalorder %s14, 1
    %p112 = por %p110, %p111
    %p114 = scmp.ne.s32.totalorder %s97, %s113
    %p115 = scmp.eq.s32.totalorder %s14, 0
    %p116 = por %p114, %p115
    %p117 = scmp.le.s32.totalorder 1, %s8
    %p118 = scmp.lt.s32.totalorder %s8, 3
    %p119 = pnand %p117, %p118
    %p120 = pneg %p119
    // Predicated region
    $region9: #{_lambda_.1} parent=5 // pred_check
      _
    $region10: #{_lambda_.1} parent=5 // pred_check_branch
      %122 = sbr.rel (%p119) target = $region12
    $region11: #{_lambda_.1} parent=5 // pred_region
      %s123 = ssub.s32 %s8, 1
      // Predicated region
      $region13: #{_lambda_.1} parent=11 // pred_check
        %p124 = pneg %p79
      $region14: #{_lambda_.1} parent=11 // pred_check_branch
        %126 = sbr.rel (%p124) target = $region16
      $region15: #{_lambda_.1} parent=11 // pred_region
        %p127 = scmp.lt.s32.totalorder %s20, 0
        %s128 = scalar_select %p127, %s20, 0
        %s129 = smul.addr %s128, 4
        %s130 = scalar_lea.vmem %s1, %s129
      $region16: #{_lambda_.1} parent=11 // pred_fallthru
        _
    $region12: #{_lambda_.1} parent=5 // pred_fallthru
      _
    %p131 = scmp.lt.s32.totalorder %s8, 2
    // Predicated region
    $region17: #{_lambda_.1} parent=5 // pred_check
      %p132 = pneg %p131
    $region18: #{_lambda_.1} parent=5 // pred_check_branch
      %134 = sbr.rel (%p132) target = $region20
    $region19: #{_lambda_.1} parent=5 // pred_region
      // Predicated region
      $region21: #{_lambda_.1} parent=19 // pred_check
        %p135 = pneg %p47
      $region22: #{_lambda_.1} parent=19 // pred_check_branch
        %137 = sbr.rel (%p135) target = $region24
      $region23: #{_lambda_.1} parent=19 // pred_region
        %p138 = scmp.lt.s32.totalorder %s15, 1
        %s139 = scalar_select %p138, %s15, 1
        %s140 = smul.addr %s139, 20
        %s141 = smul.addr %s140, 4
        %s142 = scalar_lea.vmem %s0, %s141
      $region24: #{_lambda_.1} parent=19 // pred_fallthru
        _
    $region20: #{_lambda_.1} parent=5 // pred_fallthru
      _
    %p143 = scmp.le.s32.totalorder 1, %s8
    %p144 = scmp.lt.s32.totalorder %s8, 3
    %p145 = pnand %p143, %p144
    %p146 = pneg %p145
    // Predicated region
    $region25: #{_lambda_.1} parent=5 // pred_check
      _
    $region26: #{_lambda_.1} parent=5 // pred_check_branch
      %148 = sbr.rel (%p145) target = $region28
    $region27: #{_lambda_.1} parent=5 // pred_region
      %s149 = ssub.s32 %s8, 1
      %p150 = scmp.lt.s32.totalorder %s18, 1
      %s151 = scalar_select %p150, %s18, 1
      %s152 = smul.addr %s151, 20
      %s153 = smul.addr %s152, 4
      %s154 = scalar_lea.vmem %s0, %s153
      %p155 = pneg %p53
      %p156 = pneg %p50
      %p157 = scmp.lt.s32.totalorder %s20, 0
      %s158 = scalar_select %p157, %s20, 0
      %s159 = smul.addr %s158, 4
      %s160 = scalar_lea.vmem %s1, %s159
      %p161 = pneg %p79
      %p162 = pneg %p76
      %p163 = pneg %p109
      %p164 = pneg %p106
      %s165 = smul.u32 16, %s19
      %p166 = scmp.lt.s32.totalorder %s18, 1
      %s167 = scalar_select %p166, %s18, 1
      %p168 = scmp.lt.s32.totalorder %s165, 15
      %s169 = scalar_select %p168, %s165, 15
      %p170 = scmp.lt.s32.totalorder %s20, 0
      %s171 = scalar_select %p170, %s20, 0
      %s172 = sadd.s32 %s171, %s169
      %s173 = smul.addr %s167, 16
      %s174 = sadd.s32 %s172, %s173
      %s175 = smul.addr %s174, 8
      %s176 = scalar_lea.vmem %s2, %s175
      %p177 = scmp.lt.s32.totalorder %s18, 1
      %s178 = scalar_select %p177, %s18, 1
      %s179 = smul.addr %s178, 20
      %s180 = smul.addr %s179, 4
      %s181 = scalar_lea.vmem %s0, %s180
      %p182 = scmp.lt.s32.totalorder %s20, 0
      %s183 = scalar_select %p182, %s20, 0
      %s184 = smul.addr %s183, 4
      %s185 = scalar_lea.vmem %s1, %s184
      %s186 = smul.u32 16, %s19
      %p187 = scmp.lt.s32.totalorder %s18, 1
      %s188 = scalar_select %p187, %s18, 1
      %p189 = scmp.lt.s32.totalorder %s186, 15
      %s190 = scalar_select %p189, %s186, 15
      %p191 = scmp.lt.s32.totalorder %s20, 0
      %s192 = scalar_select %p191, %s20, 0
      %s193 = sadd.s32 %s192, %s190
      %s194 = smul.addr %s188, 16
      %s195 = sadd.s32 %s193, %s194
      %s196 = smul.addr %s195, 8
      %s197 = scalar_lea.vmem %s2, %s196
      %s198 = smul.u32 16, %s19
      %s200 = smul.u32 %s19, 128
      %s201 = sshra.s32 %s200, 3
      %s202 = sand.u32 %s200, 7
      %s203 = smul.addr %s201, 4
      %s204 = scalar_lea.vmem %s181, %s203
      %v205 = vld [vmem:[%s204] sm:$0xf]
      %v206 = vld [vmem:[%s204 + $0x4] sm:$0xf]
      %v207 = vld [vmem:[%s204 + $0x8] sm:$0xf]
      %v208 = vld [vmem:[%s204 + $0xc] sm:$0xf]
      %v209 = vld [vmem:[%s204 + $0x10] sm:$0xf]
      %v210 = vld [vmem:[%s204 + $0x14] sm:$0xf]
      %v211 = vld [vmem:[%s204 + $0x18] sm:$0xf]
      %v212 = vld [vmem:[%s204 + $0x1c] sm:$0xf]
      %v213 = vld [vmem:[%s204 + $0x20] sm:$0xf]
      %v214 = vld [vmem:[%s204 + $0x24] sm:$0xf]
      %v215 = vld [vmem:[%s204 + $0x28] sm:$0xf]
      %v216 = vld [vmem:[%s204 + $0x2c] sm:$0xf]
      %v217 = vld [vmem:[%s204 + $0x30] sm:$0xf]
      %v218 = vld [vmem:[%s204 + $0x34] sm:$0xf]
      %v219 = vld [vmem:[%s204 + $0x38] sm:$0xf]
      %v220 = vld [vmem:[%s204 + $0x3c] sm:$0xf]
      %v221 = vld [vmem:[%s185] sm:$0xf]
      %v222 = vld [vmem:[%s185 + $0x4] sm:$0x3]
      %v239 = vunpack.c.l.b16 %v205
      %v240 = vunpack.c.l.b16 %v206
      %v241 = vunpack.c.l.b16 %v207
      %v242 = vunpack.c.l.b16 %v208
      %v243 = vunpack.c.l.b16 %v209
      %v244 = vunpack.c.l.b16 %v210
      %v245 = vunpack.c.l.b16 %v211
      %v246 = vunpack.c.l.b16 %v212
      %v247 = vunpack.c.l.b16 %v213
      %v248 = vunpack.c.l.b16 %v214
      %v249 = vunpack.c.l.b16 %v215
      %v250 = vunpack.c.l.b16 %v216
      %v251 = vunpack.c.l.b16 %v217
      %v252 = vunpack.c.l.b16 %v218
      %v253 = vunpack.c.l.b16 %v219
      %v254 = vunpack.c.l.b16 %v220
      %v255 = vpack.c.b16 %v240, %v239
      %v256 = vpack.c.b16 %v242, %v241
      %v257 = vpack.c.b16 %v244, %v243
      %v258 = vpack.c.b16 %v246, %v245
      %v259 = vpack.c.b16 %v248, %v247
      %v260 = vpack.c.b16 %v250, %v249
      %v261 = vpack.c.b16 %v252, %v251
      %v262 = vpack.c.b16 %v254, %v253
      %v265 = vunpack.c.l.b16 %v221
      %v266 = vunpack.c.l.b16 %v222
      %v267 = vpack.c.b16 %v266, %v265
      %vm268 = vcmask 97280
      %v270 = vsel %vm268, %v255, 0
      %v273 = vsel %vm268, %v256, 0
      %v276 = vsel %vm268, %v257, 0
      %v279 = vsel %vm268, %v258, 0
      %v282 = vsel %vm268, %v259, 0
      %v285 = vsel %vm268, %v260, 0
      %v288 = vsel %vm268, %v261, 0
      %v291 = vsel %vm268, %v262, 0
      %vm293 = vcmask 1045504
      %v295 = vsel %vm293, %v267, 0
      %297 = vmatpush.bf16.msra.mxu0 0
      %298 = vmatpush.bf16.msra.mxu0 0
      %299 = vmatpush.bf16.msra.mxu0 0
      %300 = vmatpush.bf16.msra.mxu0 0
      %301 = vmatpush.bf16.msra.mxu0 0
      %302 = vmatpush.bf16.msra.mxu0 0
      %303 = vmatpush.bf16.msra.mxu0 0
      %304 = vmatpush.bf16.msra.mxu0 %v295
      %305 = vmatmul.bf16.gmra.mxu0 %v270
      %v306 = vpop.f32.mrf.mxu0
      %v307 = vadd.f32 0.0, %v306
      %v308 = vpop.f32.mrf.mxu0
      %v309 = vadd.f32 0.0, %v308
      %310 = vmatmul.bf16.gmra.mxu0 %v273
      %v311 = vpop.f32.mrf.mxu0
      %v312 = vadd.f32 0.0, %v311
      %v313 = vpop.f32.mrf.mxu0
      %v314 = vadd.f32 0.0, %v313
      %315 = vmatmul.bf16.gmra.mxu0 %v276
      %v316 = vpop.f32.mrf.mxu0
      %v317 = vadd.f32 0.0, %v316
      %v318 = vpop.f32.mrf.mxu0
      %v319 = vadd.f32 0.0, %v318
      %320 = vmatmul.bf16.gmra.mxu0 %v279
      %v321 = vpop.f32.mrf.mxu0
      %v322 = vadd.f32 0.0, %v321
      %v323 = vpop.f32.mrf.mxu0
      %v324 = vadd.f32 0.0, %v323
      %325 = vmatmul.bf16.gmra.mxu0 %v282
      %v326 = vpop.f32.mrf.mxu0
      %v327 = vadd.f32 0.0, %v326
      %v328 = vpop.f32.mrf.mxu0
      %v329 = vadd.f32 0.0, %v328
      %330 = vmatmul.bf16.gmra.mxu0 %v285
      %v331 = vpop.f32.mrf.mxu0
      %v332 = vadd.f32 0.0, %v331
      %v333 = vpop.f32.mrf.mxu0
      %v334 = vadd.f32 0.0, %v333
      %335 = vmatmul.bf16.gmra.mxu0 %v288
      %v336 = vpop.f32.mrf.mxu0
      %v337 = vadd.f32 0.0, %v336
      %v338 = vpop.f32.mrf.mxu0
      %v339 = vadd.f32 0.0, %v338
      %340 = vmatmul.bf16.gmra.mxu0 %v291
      %v341 = vpop.f32.mrf.mxu0
      %v342 = vadd.f32 0.0, %v341
      %v343 = vpop.f32.mrf.mxu0
      %v344 = vadd.f32 0.0, %v343
      %345 = vdwg.mxu0
      %vm346 = vcmask 64512
      %347 = vst.msk [vmem:[%s197] sm:$0xff] %vm346, %v307
      %348 = vst.msk [vmem:[%s197 + $0x8] sm:$0xff] %vm346, %v309
      %349 = vst.msk [vmem:[%s197 + $0x10] sm:$0xff] %vm346, %v312
      %350 = vst.msk [vmem:[%s197 + $0x18] sm:$0xff] %vm346, %v314
      %351 = vst.msk [vmem:[%s197 + $0x20] sm:$0xff] %vm346, %v317
      %352 = vst.msk [vmem:[%s197 + $0x28] sm:$0xff] %vm346, %v319
      %353 = vst.msk [vmem:[%s197 + $0x30] sm:$0xff] %vm346, %v322
      %354 = vst.msk [vmem:[%s197 + $0x38] sm:$0xff] %vm346, %v324
      %355 = vst.msk [vmem:[%s197 + $0x40] sm:$0xff] %vm346, %v327
      %356 = vst.msk [vmem:[%s197 + $0x48] sm:$0xff] %vm346, %v329
      %357 = vst.msk [vmem:[%s197 + $0x50] sm:$0xff] %vm346, %v332
      %358 = vst.msk [vmem:[%s197 + $0x58] sm:$0xff] %vm346, %v334
      %359 = vst.msk [vmem:[%s197 + $0x60] sm:$0xff] %vm346, %v337
      %360 = vst.msk [vmem:[%s197 + $0x68] sm:$0xff] %vm346, %v339
      %361 = vst.msk [vmem:[%s197 + $0x70] sm:$0xff] %vm346, %v342
      %362 = vst.msk [vmem:[%s197 + $0x78] sm:$0xff] %vm346, %v344
      %s363 = smul.u32 %s19, 8
      %s364 = sadd.s32 %s363, 1
      %s365 = smul.u32 %s364, 16
      %s366 = sshra.s32 %s365, 3
      %s367 = sand.u32 %s365, 7
      %s368 = smul.addr %s366, 4
      %s369 = scalar_lea.vmem %s181, %s368
      %v370 = vld [vmem:[%s369] sm:$0xf]
      %v371 = vld [vmem:[%s369 + $0x4] sm:$0xf]
      %v372 = vld [vmem:[%s369 + $0x8] sm:$0xf]
      %v373 = vld [vmem:[%s369 + $0xc] sm:$0xf]
      %v374 = vld [vmem:[%s369 + $0x10] sm:$0xf]
      %v375 = vld [vmem:[%s369 + $0x14] sm:$0xf]
      %v376 = vld [vmem:[%s369 + $0x18] sm:$0xf]
      %v377 = vld [vmem:[%s369 + $0x1c] sm:$0xf]
      %v378 = vld [vmem:[%s369 + $0x20] sm:$0xf]
      %v379 = vld [vmem:[%s369 + $0x24] sm:$0xf]
      %v380 = vld [vmem:[%s369 + $0x28] sm:$0xf]
      %v381 = vld [vmem:[%s369 + $0x2c] sm:$0xf]
      %v382 = vld [vmem:[%s369 + $0x30] sm:$0xf]
      %v383 = vld [vmem:[%s369 + $0x34] sm:$0xf]
      %v384 = vld [vmem:[%s369 + $0x38] sm:$0xf]
      %v385 = vld [vmem:[%s369 + $0x3c] sm:$0xf]
      %s386 = scalar_lea.vmem %s185, 8
      %v387 = vld [vmem:[%s386] sm:$0xf]
      %v388 = vld [vmem:[%s386 + $0x4] sm:$0x3]
      %v405 = vunpack.c.l.b16 %v370
      %v406 = vunpack.c.l.b16 %v371
      %v407 = vunpack.c.l.b16 %v372
      %v408 = vunpack.c.l.b16 %v373
      %v409 = vunpack.c.l.b16 %v374
      %v410 = vunpack.c.l.b16 %v375
      %v411 = vunpack.c.l.b16 %v376
      %v412 = vunpack.c.l.b16 %v377
      %v413 = vunpack.c.l.b16 %v378
      %v414 = vunpack.c.l.b16 %v379
      %v415 = vunpack.c.l.b16 %v380
      %v416 = vunpack.c.l.b16 %v381
      %v417 = vunpack.c.l.b16 %v382
      %v418 = vunpack.c.l.b16 %v383
      %v419 = vunpack.c.l.b16 %v384
      %v420 = vunpack.c.l.b16 %v385
      %v421 = vpack.c.b16 %v406, %v405
      %v422 = vpack.c.b16 %v408, %v407
      %v423 = vpack.c.b16 %v410, %v409
      %v424 = vpack.c.b16 %v412, %v411
      %v425 = vpack.c.b16 %v414, %v413
      %v426 = vpack.c.b16 %v416, %v415
      %v427 = vpack.c.b16 %v418, %v417
      %v428 = vpack.c.b16 %v420, %v419
      %v431 = vunpack.c.l.b16 %v387
      %v432 = vunpack.c.l.b16 %v388
      %v433 = vpack.c.b16 %v432, %v431
      %v435 = vsel %vm268, %v421, 0
      %v438 = vsel %vm268, %v422, 0
      %v441 = vsel %vm268, %v423, 0
      %v444 = vsel %vm268, %v424, 0
      %v447 = vsel %vm268, %v425, 0
      %v450 = vsel %vm268, %v426, 0
      %v453 = vsel %vm268, %v427, 0
      %v456 = vsel %vm268, %v428, 0
      %v459 = vsel %vm293, %v433, 0
      %461 = vmatpush.bf16.msra.mxu0 0
      %462 = vmatpush.bf16.msra.mxu0 0
      %463 = vmatpush.bf16.msra.mxu0 0
      %464 = vmatpush.bf16.msra.mxu0 0
      %465 = vmatpush.bf16.msra.mxu0 0
      %466 = vmatpush.bf16.msra.mxu0 0
      %467 = vmatpush.bf16.msra.mxu0 0
      %468 = vmatpush.bf16.msra.mxu0 %v459
      %469 = vmatmul.bf16.gmra.mxu0 %v435
      %v470 = vpop.f32.mrf.mxu0
      %v471 = vadd.f32 0.0, %v470
      %v472 = vpop.f32.mrf.mxu0
      %v473 = vadd.f32 0.0, %v472
      %474 = vmatmul.bf16.gmra.mxu0 %v438
      %v475 = vpop.f32.mrf.mxu0
      %v476 = vadd.f32 0.0, %v475
      %v477 = vpop.f32.mrf.mxu0
      %v478 = vadd.f32 0.0, %v477
      %479 = vmatmul.bf16.gmra.mxu0 %v441
      %v480 = vpop.f32.mrf.mxu0
      %v481 = vadd.f32 0.0, %v480
      %v482 = vpop.f32.mrf.mxu0
      %v483 = vadd.f32 0.0, %v482
      %484 = vmatmul.bf16.gmra.mxu0 %v444
      %v485 = vpop.f32.mrf.mxu0
      %v486 = vadd.f32 0.0, %v485
      %v487 = vpop.f32.mrf.mxu0
      %v488 = vadd.f32 0.0, %v487
      %489 = vmatmul.bf16.gmra.mxu0 %v447
      %v490 = vpop.f32.mrf.mxu0
      %v491 = vadd.f32 0.0, %v490
      %v492 = vpop.f32.mrf.mxu0
      %v493 = vadd.f32 0.0, %v492
      %494 = vmatmul.bf16.gmra.mxu0 %v450
      %v495 = vpop.f32.mrf.mxu0
      %v496 = vadd.f32 0.0, %v495
      %v497 = vpop.f32.mrf.mxu0
      %v498 = vadd.f32 0.0, %v497
      %499 = vmatmul.bf16.gmra.mxu0 %v453
      %v500 = vpop.f32.mrf.mxu0
      %v501 = vadd.f32 0.0, %v500
      %v502 = vpop.f32.mrf.mxu0
      %v503 = vadd.f32 0.0, %v502
      %504 = vmatmul.bf16.gmra.mxu0 %v456
      %v505 = vpop.f32.mrf.mxu0
      %v506 = vadd.f32 0.0, %v505
      %v507 = vpop.f32.mrf.mxu0
      %v508 = vadd.f32 0.0, %v507
      %509 = vdwg.mxu0
      %v510 = vld [vmem:[%s197] sm:$0xff]
      %v511 = vld [vmem:[%s197 + $0x8] sm:$0xff]
      %v512 = vld [vmem:[%s197 + $0x10] sm:$0xff]
      %v513 = vld [vmem:[%s197 + $0x18] sm:$0xff]
      %v514 = vld [vmem:[%s197 + $0x20] sm:$0xff]
      %v515 = vld [vmem:[%s197 + $0x28] sm:$0xff]
      %v516 = vld [vmem:[%s197 + $0x30] sm:$0xff]
      %v517 = vld [vmem:[%s197 + $0x38] sm:$0xff]
      %v518 = vld [vmem:[%s197 + $0x40] sm:$0xff]
      %v519 = vld [vmem:[%s197 + $0x48] sm:$0xff]
      %v520 = vld [vmem:[%s197 + $0x50] sm:$0xff]
      %v521 = vld [vmem:[%s197 + $0x58] sm:$0xff]
      %v522 = vld [vmem:[%s197 + $0x60] sm:$0xff]
      %v523 = vld [vmem:[%s197 + $0x68] sm:$0xff]
      %v524 = vld [vmem:[%s197 + $0x70] sm:$0xff]
      %v525 = vld [vmem:[%s197 + $0x78] sm:$0xff]
      %v526 = vadd.f32 %v510, %v471
      %v527 = vadd.f32 %v511, %v473
      %v528 = vadd.f32 %v512, %v476
      %v529 = vadd.f32 %v513, %v478
      %v530 = vadd.f32 %v514, %v481
      %v531 = vadd.f32 %v515, %v483
      %v532 = vadd.f32 %v516, %v486
      %v533 = vadd.f32 %v517, %v488
      %v534 = vadd.f32 %v518, %v491
      %v535 = vadd.f32 %v519, %v493
      %v536 = vadd.f32 %v520, %v496
      %v537 = vadd.f32 %v521, %v498
      %v538 = vadd.f32 %v522, %v501
      %v539 = vadd.f32 %v523, %v503
      %v540 = vadd.f32 %v524, %v506
      %v541 = vadd.f32 %v525, %v508
      %542 = vst.msk [vmem:[%s197] sm:$0xff] %vm346, %v526
      %543 = vst.msk [vmem:[%s197 + $0x8] sm:$0xff] %vm346, %v527
      %544 = vst.msk [vmem:[%s197 + $0x10] sm:$0xff] %vm346, %v528
      %545 = vst.msk [vmem:[%s197 + $0x18] sm:$0xff] %vm346, %v529
      %546 = vst.msk [vmem:[%s197 + $0x20] sm:$0xff] %vm346, %v530
      %547 = vst.msk [vmem:[%s197 + $0x28] sm:$0xff] %vm346, %v531
      %548 = vst.msk [vmem:[%s197 + $0x30] sm:$0xff] %vm346, %v532
      %549 = vst.msk [vmem:[%s197 + $0x38] sm:$0xff] %vm346, %v533
      %550 = vst.msk [vmem:[%s197 + $0x40] sm:$0xff] %vm346, %v534
      %551 = vst.msk [vmem:[%s197 + $0x48] sm:$0xff] %vm346, %v535
      %552 = vst.msk [vmem:[%s197 + $0x50] sm:$0xff] %vm346, %v536
      %553 = vst.msk [vmem:[%s197 + $0x58] sm:$0xff] %vm346, %v537
      %554 = vst.msk [vmem:[%s197 + $0x60] sm:$0xff] %vm346, %v538
      %555 = vst.msk [vmem:[%s197 + $0x68] sm:$0xff] %vm346, %v539
      %556 = vst.msk [vmem:[%s197 + $0x70] sm:$0xff] %vm346, %v540
      %557 = vst.msk [vmem:[%s197 + $0x78] sm:$0xff] %vm346, %v541
      %s558 = sadd.s32 %s363, 2
      %s559 = smul.u32 %s558, 16
      %s560 = sshra.s32 %s559, 3
      %s561 = sand.u32 %s559, 7
      %s562 = smul.addr %s560, 4
      %s563 = scalar_lea.vmem %s181, %s562
      %v564 = vld [vmem:[%s563] sm:$0xf]
      %v565 = vld [vmem:[%s563 + $0x4] sm:$0xf]
      %v566 = vld [vmem:[%s563 + $0x8] sm:$0xf]
      %v567 = vld [vmem:[%s563 + $0xc] sm:$0xf]
      %v568 = vld [vmem:[%s563 + $0x10] sm:$0xf]
      %v569 = vld [vmem:[%s563 + $0x14] sm:$0xf]
      %v570 = vld [vmem:[%s563 + $0x18] sm:$0xf]
      %v571 = vld [vmem:[%s563 + $0x1c] sm:$0xf]
      %v572 = vld [vmem:[%s563 + $0x20] sm:$0xf]
      %v573 = vld [vmem:[%s563 + $0x24] sm:$0xf]
      %v574 = vld [vmem:[%s563 + $0x28] sm:$0xf]
      %v575 = vld [vmem:[%s563 + $0x2c] sm:$0xf]
      %v576 = vld [vmem:[%s563 + $0x30] sm:$0xf]
      %v577 = vld [vmem:[%s563 + $0x34] sm:$0xf]
      %v578 = vld [vmem:[%s563 + $0x38] sm:$0xf]
      %v579 = vld [vmem:[%s563 + $0x3c] sm:$0xf]
      %s580 = scalar_lea.vmem %s185, 16
      %v581 = vld [vmem:[%s580] sm:$0xf]
      %v582 = vld [vmem:[%s580 + $0x4] sm:$0x3]
      %v599 = vunpack.c.l.b16 %v564
      %v600 = vunpack.c.l.b16 %v565
      %v601 = vunpack.c.l.b16 %v566
      %v602 = vunpack.c.l.b16 %v567
      %v603 = vunpack.c.l.b16 %v568
      %v604 = vunpack.c.l.b16 %v569
      %v605 = vunpack.c.l.b16 %v570
      %v606 = vunpack.c.l.b16 %v571
      %v607 = vunpack.c.l.b16 %v572
      %v608 = vunpack.c.l.b16 %v573
      %v609 = vunpack.c.l.b16 %v574
      %v610 = vunpack.c.l.b16 %v575
      %v611 = vunpack.c.l.b16 %v576
      %v612 = vunpack.c.l.b16 %v577
      %v613 = vunpack.c.l.b16 %v578
      %v614 = vunpack.c.l.b16 %v579
      %v615 = vpack.c.b16 %v600, %v599
      %v616 = vpack.c.b16 %v602, %v601
      %v617 = vpack.c.b16 %v604, %v603
      %v618 = vpack.c.b16 %v606, %v605
      %v619 = vpack.c.b16 %v608, %v607
      %v620 = vpack.c.b16 %v610, %v609
      %v621 = vpack.c.b16 %v612, %v611
      %v622 = vpack.c.b16 %v614, %v613
      %v625 = vunpack.c.l.b16 %v581
      %v626 = vunpack.c.l.b16 %v582
      %v627 = vpack.c.b16 %v626, %v625
      %v629 = vsel %vm268, %v615, 0
      %v632 = vsel %vm268, %v616, 0
      %v635 = vsel %vm268, %v617, 0
      %v638 = vsel %vm268, %v618, 0
      %v641 = vsel %vm268, %v619, 0
      %v644 = vsel %vm268, %v620, 0
      %v647 = vsel %vm268, %v621, 0
      %v650 = vsel %vm268, %v622, 0
      %v653 = vsel %vm293, %v627, 0
      %655 = vmatpush.bf16.msra.mxu0 0
      %656 = vmatpush.bf16.msra.mxu0 0
      %657 = vmatpush.bf16.msra.mxu0 0
      %658 = vmatpush.bf16.msra.mxu0 0
      %659 = vmatpush.bf16.msra.mxu0 0
      %660 = vmatpush.bf16.msra.mxu0 0
      %661 = vmatpush.bf16.msra.mxu0 0
      %662 = vmatpush.bf16.msra.mxu0 %v653
      %663 = vmatmul.bf16.gmra.mxu0 %v629
      %v664 = vpop.f32.mrf.mxu0
      %v665 = vadd.f32 0.0, %v664
      %v666 = vpop.f32.mrf.mxu0
      %v667 = vadd.f32 0.0, %v666
      %668 = vmatmul.bf16.gmra.mxu0 %v632
      %v669 = vpop.f32.mrf.mxu0
      %v670 = vadd.f32 0.0, %v669
      %v671 = vpop.f32.mrf.mxu0
      %v672 = vadd.f32 0.0, %v671
      %673 = vmatmul.bf16.gmra.mxu0 %v635
      %v674 = vpop.f32.mrf.mxu0
      %v675 = vadd.f32 0.0, %v674
      %v676 = vpop.f32.mrf.mxu0
      %v677 = vadd.f32 0.0, %v676
      %678 = vmatmul.bf16.gmra.mxu0 %v638
      %v679 = vpop.f32.mrf.mxu0
      %v680 = vadd.f32 0.0, %v679
      %v681 = vpop.f32.mrf.mxu0
      %v682 = vadd.f32 0.0, %v681
      %683 = vmatmul.bf16.gmra.mxu0 %v641
      %v684 = vpop.f32.mrf.mxu0
      %v685 = vadd.f32 0.0, %v684
      %v686 = vpop.f32.mrf.mxu0
      %v687 = vadd.f32 0.0, %v686
      %688 = vmatmul.bf16.gmra.mxu0 %v644
      %v689 = vpop.f32.mrf.mxu0
      %v690 = vadd.f32 0.0, %v689
      %v691 = vpop.f32.mrf.mxu0
      %v692 = vadd.f32 0.0, %v691
      %693 = vmatmul.bf16.gmra.mxu0 %v647
      %v694 = vpop.f32.mrf.mxu0
      %v695 = vadd.f32 0.0, %v694
      %v696 = vpop.f32.mrf.mxu0
      %v697 = vadd.f32 0.0, %v696
      %698 = vmatmul.bf16.gmra.mxu0 %v650
      %v699 = vpop.f32.mrf.mxu0
      %v700 = vadd.f32 0.0, %v699
      %v701 = vpop.f32.mrf.mxu0
      %v702 = vadd.f32 0.0, %v701
      %703 = vdwg.mxu0
      %v704 = vld [vmem:[%s197] sm:$0xff]
      %v705 = vld [vmem:[%s197 + $0x8] sm:$0xff]
      %v706 = vld [vmem:[%s197 + $0x10] sm:$0xff]
      %v707 = vld [vmem:[%s197 + $0x18] sm:$0xff]
      %v708 = vld [vmem:[%s197 + $0x20] sm:$0xff]
      %v709 = vld [vmem:[%s197 + $0x28] sm:$0xff]
      %v710 = vld [vmem:[%s197 + $0x30] sm:$0xff]
      %v711 = vld [vmem:[%s197 + $0x38] sm:$0xff]
      %v712 = vld [vmem:[%s197 + $0x40] sm:$0xff]
      %v713 = vld [vmem:[%s197 + $0x48] sm:$0xff]
      %v714 = vld [vmem:[%s197 + $0x50] sm:$0xff]
      %v715 = vld [vmem:[%s197 + $0x58] sm:$0xff]
      %v716 = vld [vmem:[%s197 + $0x60] sm:$0xff]
      %v717 = vld [vmem:[%s197 + $0x68] sm:$0xff]
      %v718 = vld [vmem:[%s197 + $0x70] sm:$0xff]
      %v719 = vld [vmem:[%s197 + $0x78] sm:$0xff]
      %v720 = vadd.f32 %v704, %v665
      %v721 = vadd.f32 %v705, %v667
      %v722 = vadd.f32 %v706, %v670
      %v723 = vadd.f32 %v707, %v672
      %v724 = vadd.f32 %v708, %v675
      %v725 = vadd.f32 %v709, %v677
      %v726 = vadd.f32 %v710, %v680
      %v727 = vadd.f32 %v711, %v682
      %v728 = vadd.f32 %v712, %v685
      %v729 = vadd.f32 %v713, %v687
      %v730 = vadd.f32 %v714, %v690
      %v731 = vadd.f32 %v715, %v692
      %v732 = vadd.f32 %v716, %v695
      %v733 = vadd.f32 %v717, %v697
      %v734 = vadd.f32 %v718, %v700
      %v735 = vadd.f32 %v719, %v702
      %736 = vst.msk [vmem:[%s197] sm:$0xff] %vm346, %v720
      %737 = vst.msk [vmem:[%s197 + $0x8] sm:$0xff] %vm346, %v721
      %738 = vst.msk [vmem:[%s197 + $0x10] sm:$0xff] %vm346, %v722
      %739 = vst.msk [vmem:[%s197 + $0x18] sm:$0xff] %vm346, %v723
      %740 = vst.msk [vmem:[%s197 + $0x20] sm:$0xff] %vm346, %v724
      %741 = vst.msk [vmem:[%s197 + $0x28] sm:$0xff] %vm346, %v725
      %742 = vst.msk [vmem:[%s197 + $0x30] sm:$0xff] %vm346, %v726
      %743 = vst.msk [vmem:[%s197 + $0x38] sm:$0xff] %vm346, %v727
      %744 = vst.msk [vmem:[%s197 + $0x40] sm:$0xff] %vm346, %v728
      %745 = vst.msk [vmem:[%s197 + $0x48] sm:$0xff] %vm346, %v729
      %746 = vst.msk [vmem:[%s197 + $0x50] sm:$0xff] %vm346, %v730
      %747 = vst.msk [vmem:[%s197 + $0x58] sm:$0xff] %vm346, %v731
      %748 = vst.msk [vmem:[%s197 + $0x60] sm:$0xff] %vm346, %v732
      %749 = vst.msk [vmem:[%s197 + $0x68] sm:$0xff] %vm346, %v733
      %750 = vst.msk [vmem:[%s197 + $0x70] sm:$0xff] %vm346, %v734
      %751 = vst.msk [vmem:[%s197 + $0x78] sm:$0xff] %vm346, %v735
      %s752 = smul.u32 16, %s19
      %p753 = scmp.lt.s32.totalorder %s18, 1
      %s754 = scalar_select %p753, %s18, 1
      %p755 = scmp.lt.s32.totalorder %s752, 15
      %s756 = scalar_select %p755, %s752, 15
      %p757 = scmp.lt.s32.totalorder %s20, 0
      %s758 = scalar_select %p757, %s20, 0
      %s759 = sadd.s32 %s758, %s756
      %s760 = smul.addr %s754, 16
      %s761 = sadd.s32 %s759, %s760
      %s762 = smul.addr %s761, 8
      %s763 = scalar_lea.vmem %s2, %s762
      // Predicated region
      $region29: #{_lambda_.1} parent=27 // pred_check
        %p764 = pneg %p106
      $region30: #{_lambda_.1} parent=27 // pred_check_branch
        %766 = sbr.rel (%p764) target = $region32
      $region31: #{_lambda_.1} parent=27 // pred_region
        %s767 = smul.u32 16, %s19
      $region32: #{_lambda_.1} parent=27 // pred_fallthru
        _
    $region28: #{_lambda_.1} parent=5 // pred_fallthru
      _
    %p768 = scmp.le.s32.totalorder 2, %s8
    // Predicated region
    $region33: #{_lambda_.1} parent=5 // pred_check
      %p769 = pneg %p768
    $region34: #{_lambda_.1} parent=5 // pred_check_branch
      %771 = sbr.rel (%p769) target = $region36
    $region35: #{_lambda_.1} parent=5 // pred_region
      %s772 = ssub.s32 %s8, 2
      // Predicated region
      $region37: #{_lambda_.1} parent=35 // pred_check
        %p773 = pneg %p112
      $region38: #{_lambda_.1} parent=35 // pred_check_branch
        %775 = sbr.rel (%p773) target = $region40
      $region39: #{_lambda_.1} parent=35 // pred_region
        %s776 = smul.u32 16, %s22
        %p777 = scmp.lt.s32.totalorder %s21, 1
        %s778 = scalar_select %p777, %s21, 1
        %p779 = scmp.lt.s32.totalorder %s776, 15
        %s780 = scalar_select %p779, %s776, 15
        %p781 = scmp.lt.s32.totalorder %s23, 0
        %s782 = scalar_select %p781, %s23, 0
        %s783 = sadd.s32 %s782, %s780
        %s784 = smul.addr %s778, 16
        %s785 = sadd.s32 %s783, %s784
        %s786 = smul.addr %s785, 8
        %s787 = scalar_lea.vmem %s2, %s786
      $region40: #{_lambda_.1} parent=35 // pred_fallthru
        _
    $region36: #{_lambda_.1} parent=5 // pred_fallthru
      _
  $region6: #{_lambda_.1} parent=0 // loop_footer
    %s12 = sadd.s32 1, %s8
  $region7: #{_lambda_.1} parent=0 // loop_footer_branch
    %7 = sbr.rel target = $region3
  $region8: #{_lambda_.1} parent=0 // loop_exit
    _

</llo_original>
